<compile_context>
chip_gen: v6e
topology: v6e:2x2x1
jax: 0.10.0
libtpu: 0.0.40
codegen_flags: <defaults>
</compile_context>

<pallas_src>
import math
from functools import partial

import jax
import jax.numpy as jnp
import numpy as np
from jax import lax
from jax.experimental import pallas as pl
from jax.experimental.pallas import tpu as pltpu


# --------------------------------------------------------------------------
# Fused kernel: permutation ranks from raw bits + per-sample scores w.
# Layout: word axis n on sublanes, sample axis Tk on lanes.
# --------------------------------------------------------------------------
def _is_scores_kernel(bits_ref, bigram_ref, start_ref, end_ref, w_ref):
    n, tk = bits_ref.shape
    bits = bits_ref[...]                                    # (n, tk) uint32

    # 23 high-entropy bits with the word index packed into the low 8 bits ->
    # distinct, non-negative int32 keys (strict total order, one compare per
    # pair).  Collision bias of the 23-bit key is negligible for n <= 256.
    hi = (bits >> 9).astype(jnp.int32)                      # (n, tk) in [0, 2^23)
    word = lax.broadcasted_iota(jnp.int32, (n, 1), 0)       # (n, 1)
    key = (hi << 8) | word                                  # (n, tk)

    # rank[a, s] = position of word a in sample s = #{b : key[b,s] < key[a,s]}.
    # The summed axis is the outermost one -> plain VPU adds across vregs.
    less = (key[:, None, :] < key[None, :, :]).astype(jnp.int32)   # (b, a, s)
    rank = jnp.sum(less, axis=0)                            # (n, tk)

    # Successor mask: nxt[a, b, s] == True iff word b directly follows word a
    # in sample s.  w_big[s] = sum_{a,b} nxt[a,b,s] * bigram[a,b].
    nxt = rank[None, :, :] == (rank[:, None, :] + 1)        # (a, b, s) bool
    big3 = bigram_ref[...][:, :, None]                      # (n, n, 1)
    w_big = jnp.sum(jnp.sum(jnp.where(nxt, big3, 0.0), axis=0),
                    axis=0, keepdims=True)                  # (1, tk)

    w_start = jnp.sum(jnp.where(rank == 0, start_ref[...], 0.0),
                      axis=0, keepdims=True)                # (1, tk)
    w_end = jnp.sum(jnp.where(rank == n - 1, end_ref[...], 0.0),
                    axis=0, keepdims=True)                  # (1, tk)

    w_ref[...] = w_big + w_start + w_end


def _pick_block_k(k, n, budget_bytes=20 * 1024 * 1024):
    """Largest sample-axis tile whose (n, n, Tk) intermediates fit VMEM."""
    # ~3 f32 (n, n, Tk) temporaries live at once in the hot region.
    max_tk = max(1, budget_bytes // (3 * n * n * 4))
    if max_tk >= k:
        return k
    if max_tk >= 128:
        return (max_tk // 128) * 128      # full lanes, block-aligned
    # TODO(synk): extremely large n with large k would additionally need an
    # n-axis tiling; fall back to 128 lanes.
    return min(k, 128)


@partial(jax.jit, static_argnames=("block_k",))
def _is_loss_impl(bits, bigram_eff, start_col, end_col, log_const, block_k):
    n, k = bits.shape
    grid = (pl.cdiv(k, block_k),)

    w = pl.pallas_call(
        _is_scores_kernel,
        out_shape=jax.ShapeDtypeStruct((1, k), jnp.float32),
        grid_spec=pltpu.PrefetchScalarGridSpec(
            num_scalar_prefetch=0,
            grid=grid,
            in_specs=[
                pl.BlockSpec((n, block_k), lambda i: (0, i)),   # random bits
                pl.BlockSpec((n, n), lambda i: (0, 0)),         # bigram, resident
                pl.BlockSpec((n, 1), lambda i: (0, 0)),         # start, resident
                pl.BlockSpec((n, 1), lambda i: (0, 0)),         # end, resident
            ],
            out_specs=pl.BlockSpec((1, block_k), lambda i: (0, i)),
        ),
        compiler_params=pltpu.CompilerParams(
            dimension_semantics=("parallel",),
            vmem_limit_bytes=48 * 1024 * 1024,
        ),
    )(bits, bigram_eff, start_col, end_col)

    w = w[0, :]                                              # (k,)

    # gold score: start[0] + end[-1] + sum_i bigram[i, i+1]   (tiny, plain XLA)
    gold = (start_col[0, 0] + end_col[n - 1, 0]
            + jnp.sum(jnp.diagonal(bigram_eff, offset=1)))

    # tiny (k,) reductions stay outside the kernel, fused under this jit
    m = jnp.max(w)
    lse = m + jnp.log(jnp.sum(jnp.exp(w - m)))
    log_z = log_const + lse
    loss = jnp.reshape(-gold + log_z, (1,))
    n_worse = jnp.sum(gold + jnp.float32(1e-6) >= w, dtype=jnp.int32)
    return loss, n_worse


# --------------------------------------------------------------------------
# Sampler: ISLoss consumes only the raw bits (sample_bits) and builds the
# permutations inside the fused kernel.  __call__ is kept for compatibility /
# testing and produces exactly the same permutations (same keys, argsort).
# --------------------------------------------------------------------------
class RandomSampler:
    def __init__(self, n_samples, key=None):
        self.k = int(n_samples)
        self.key = jax.random.PRNGKey(0) if key is None else key

    def sample_bits(self, n_words):
        n = int(n_words)
        assert n <= 256, "index-packed sort key supports n_words <= 256"
        return jax.random.bits(self.key, (n, self.k), dtype=jnp.uint32)

    def __call__(self, n_words, bigram=None, start=None, end=None,
                 bigram_bias=None):
        n = int(n_words)
        bits = self.sample_bits(n)                           # (n, k)
        hi = (bits >> 9).astype(jnp.int32)
        word = jnp.arange(n, dtype=jnp.int32)[:, None]
        key = (hi << 8) | word                               # strict total order
        # samples[s, j] = word placed at position j of sample s
        return jnp.argsort(key, axis=0).T.astype(jnp.int32)  # (k, n)

    forward = __call__


# --------------------------------------------------------------------------
# ISLoss
# --------------------------------------------------------------------------
class ISLoss:
    """Pallas/JAX port of learnperm.loss.ISLoss (default IS branch)."""

    def __init__(self, sampler, combine=False, reverse=False):
        self.sampler = sampler
        self.combine = combine
        self.reverse = reverse

    def forward(self, bigram, start, end, bigram_bias=None):
        # TODO(synk): combine / reverse branches raise RuntimeError('To check')
        # in the reference implementation and are not implemented here either.
        if self.combine or self.reverse:
            raise RuntimeError("To check")

        n_words = int(start.shape[0])
        b2 = jnp.squeeze(bigram, axis=2).astype(jnp.float32)        # (n, n)
        s_col = jnp.reshape(start, (n_words, 1)).astype(jnp.float32)
        e_col = jnp.reshape(end, (n_words, 1)).astype(jnp.float32)

        # bigram_bias is added at exactly the same (i, j) indices as bigram in
        # both the gold score and the sample scores -> fold into one matrix.
        b_eff = b2 if bigram_bias is None else b2 + bigram_bias.astype(jnp.float32)

        bits = self.sampler.sample_bits(n_words)                    # (n, k) u32
        n_samples = int(bits.shape[1])

        log_const = jnp.float32(math.lgamma(n_words + 1) - math.log(n_samples))
        block_k = _pick_block_k(n_samples, n_words)

        loss, n_worse = _is_loss_impl(bits, b_eff, s_col, e_col,
                                      log_const, block_k=block_k)
        # n_worse stays on-device (no blocking host sync); callers needing the
        # torch-style Python int can call int(n_worse) lazily.
        return loss, n_worse

    __call__ = forward


# --------------------------------------------------------------------------
if __name__ == "__main__":
    key = jax.random.PRNGKey(0)
    kb, ks, ke, kbias, ksamp = jax.random.split(key, 5)

    n_words = 16
    n_samples = 8

    bigram = jax.random.normal(kb, (n_words, n_words, 1), dtype=jnp.float32)
    start = jax.random.normal(ks, (n_words, 1), dtype=jnp.float32)
    end = jax.random.normal(ke, (n_words, 1), dtype=jnp.float32)
    bigram_bias = jax.random.normal(kbias, (n_words, n_words), dtype=jnp.float32)

    sampler = RandomSampler(n_samples, key=ksamp)
    loss_mod = ISLoss(sampler)

    loss, n_worse = loss_mod(bigram, start, end)
    loss = jax.block_until_ready(loss)
    loss_b, n_worse_b = loss_mod(bigram, start, end, bigram_bias=bigram_bias)
    loss_b = jax.block_until_ready(loss_b)

    # ---------------- reference check (pure numpy) -------------------------
    samples = np.asarray(jax.block_until_ready(sampler(n_words)))
    assert samples.shape == (n_samples, n_words), samples.shape
    expected = np.arange(n_words)
    for row in samples:
        assert np.array_equal(np.sort(row), expected), row

    def ref_loss(b2, s, e, smp):
        ar = np.arange(n_words)
        gold = s[0] + e[-1] + b2[ar[:-1], ar[1:]].sum()
        w = (b2[smp[:, :-1], smp[:, 1:]].sum(axis=1)
             + s[smp[:, 0]] + e[smp[:, -1]])
        n_w = int(np.sum(gold + 1e-6 >= w))
        m = w.max()
        lse = m + np.log(np.exp(w - m).sum())
        l = (-gold + math.log(math.factorial(n_words))
             - math.log(n_samples) + lse)
        return l, n_w

    b2 = np.asarray(bigram)[:, :, 0]
    s_v = np.asarray(start)[:, 0]
    e_v = np.asarray(end)[:, 0]

    ref0, ref_nw0 = ref_loss(b2, s_v, e_v, samples)
    ref1, ref_nw1 = ref_loss(b2 + np.asarray(bigram_bias), s_v, e_v, samples)

    assert np.allclose(np.asarray(loss)[0], ref0, rtol=1e-3, atol=1e-3), \
        (np.asarray(loss)[0], ref0)
    assert int(n_worse) == ref_nw0, (int(n_worse), ref_nw0)
    assert np.allclose(np.asarray(loss_b)[0], ref1, rtol=1e-3, atol=1e-3), \
        (np.asarray(loss_b)[0], ref1)
    assert int(n_worse_b) == ref_nw1, (int(n_worse_b), ref_nw1)

    print("KERNEL_OK")
</pallas_src>

<mosaic_0001>
module attributes {stable_mosaic.version = 11 : i64} {
  func.func @_is_scores_kernel(%arg0: i32, %arg1: memref<16x8xi32, #tpu.memory_space<vmem>>, %arg2: memref<16x16xf32, #tpu.memory_space<vmem>>, %arg3: memref<16x1xf32, #tpu.memory_space<vmem>>, %arg4: memref<16x1xf32, #tpu.memory_space<vmem>>, %arg5: memref<1x8xf32, #tpu.memory_space<vmem>>) attributes {dimension_semantics = [#tpu.dimension_semantics<parallel>], iteration_bounds = array<i64: 1>, scalar_prefetch = 0 : i64, scratch_operands = 0 : i64, tpu.core_type = #tpu.core_type<tc>, window_params = [{transform_indices = @transform_0, window_bounds = array<i64: 16, 8>}, {pipeline_mode = #tpu.pipeline_mode<synchronous>, transform_indices = @transform_1, window_bounds = array<i64: 16, 16>}, {pipeline_mode = #tpu.pipeline_mode<synchronous>, transform_indices = @transform_2, window_bounds = array<i64: 16, 1>}, {pipeline_mode = #tpu.pipeline_mode<synchronous>, transform_indices = @transform_3, window_bounds = array<i64: 16, 1>}, {transform_indices = @transform_4, window_bounds = array<i64: 1, 8>}]} {
    %c0 = arith.constant 0 : index
    %c0_0 = arith.constant 0 : index
    %0 = vector.load %arg1[%c0, %c0_0] : memref<16x8xi32, #tpu.memory_space<vmem>>, vector<16x8xi32>
    %c9_i32 = arith.constant 9 : i32
    %1 = vector.broadcast %c9_i32 : i32 to vector<16x8xi32>
    %2 = arith.shrui %0, %1 : vector<16x8xi32>
    %3 = tpu.iota {dimensions = array<i32: 0>} : vector<16x1xi32>
    %c8_i32 = arith.constant 8 : i32
    %4 = vector.broadcast %c8_i32 : i32 to vector<16x8xi32>
    %5 = arith.shli %2, %4 : vector<16x8xi32>
    %6 = vector.broadcast %3 : vector<16x1xi32> to vector<16x8xi32>
    %7 = arith.ori %5, %6 : vector<16x8xi32>
    %8 = vector.shape_cast %7 : vector<16x8xi32> to vector<16x1x8xi32>
    %9 = vector.shape_cast %7 : vector<16x8xi32> to vector<1x16x8xi32>
    %10 = vector.broadcast %8 : vector<16x1x8xi32> to vector<16x16x8xi32>
    %11 = vector.broadcast %9 : vector<1x16x8xi32> to vector<16x16x8xi32>
    %12 = arith.cmpi slt, %10, %11 : vector<16x16x8xi32>
    %13 = arith.extui %12 : vector<16x16x8xi1> to vector<16x16x8xi32>
    %cst = arith.constant dense<0> : vector<16x8xi32>
    %14 = vector.multi_reduction <add>, %13, %cst [0] : vector<16x16x8xi32> to vector<16x8xi32>
    %15 = vector.shape_cast %14 : vector<16x8xi32> to vector<1x16x8xi32>
    %16 = vector.shape_cast %14 : vector<16x8xi32> to vector<16x1x8xi32>
    %c1_i32 = arith.constant 1 : i32
    %17 = vector.broadcast %c1_i32 : i32 to vector<16x1x8xi32>
    %18 = arith.addi %16, %17 : vector<16x1x8xi32>
    %19 = vector.broadcast %15 : vector<1x16x8xi32> to vector<16x16x8xi32>
    %20 = vector.broadcast %18 : vector<16x1x8xi32> to vector<16x16x8xi32>
    %21 = arith.cmpi eq, %19, %20 : vector<16x16x8xi32>
    %c0_1 = arith.constant 0 : index
    %c0_2 = arith.constant 0 : index
    %22 = vector.load %arg2[%c0_1, %c0_2] : memref<16x16xf32, #tpu.memory_space<vmem>>, vector<16x16xf32>
    %23 = vector.shape_cast %22 : vector<16x16xf32> to vector<16x16x1xf32>
    %cst_3 = arith.constant 0.000000e+00 : f32
    %24 = vector.shape_cast %23 : vector<16x16x1xf32> to vector<16x16x1xf32>
    %25 = vector.broadcast %24 : vector<16x16x1xf32> to vector<16x16x8xf32>
    %26 = vector.broadcast %cst_3 : f32 to vector<16x16x8xf32>
    %27 = arith.select %21, %25, %26 : vector<16x16x8xi1>, vector<16x16x8xf32>
    %cst_4 = arith.constant dense<0.000000e+00> : vector<16x8xf32>
    %28 = vector.multi_reduction <add>, %27, %cst_4 [0] : vector<16x16x8xf32> to vector<16x8xf32>
    %cst_5 = arith.constant dense<0.000000e+00> : vector<8xf32>
    %29 = vector.multi_reduction <add>, %28, %cst_5 [0] : vector<16x8xf32> to vector<8xf32>
    %30 = vector.shape_cast %29 : vector<8xf32> to vector<1x8xf32>
    %c0_i32 = arith.constant 0 : i32
    %31 = vector.broadcast %c0_i32 : i32 to vector<16x8xi32>
    %32 = arith.cmpi eq, %14, %31 : vector<16x8xi32>
    %c0_6 = arith.constant 0 : index
    %c0_7 = arith.constant 0 : index
    %33 = vector.load %arg3[%c0_6, %c0_7] : memref<16x1xf32, #tpu.memory_space<vmem>>, vector<16x1xf32>
    %cst_8 = arith.constant 0.000000e+00 : f32
    %34 = vector.shape_cast %33 : vector<16x1xf32> to vector<16x1xf32>
    %35 = vector.broadcast %34 : vector<16x1xf32> to vector<16x8xf32>
    %36 = vector.broadcast %cst_8 : f32 to vector<16x8xf32>
    %37 = arith.select %32, %35, %36 : vector<16x8xi1>, vector<16x8xf32>
    %cst_9 = arith.constant dense<0.000000e+00> : vector<8xf32>
    %38 = vector.multi_reduction <add>, %37, %cst_9 [0] : vector<16x8xf32> to vector<8xf32>
    %39 = vector.shape_cast %38 : vector<8xf32> to vector<1x8xf32>
    %c15_i32 = arith.constant 15 : i32
    %40 = vector.broadcast %c15_i32 : i32 to vector<16x8xi32>
    %41 = arith.cmpi eq, %14, %40 : vector<16x8xi32>
    %c0_10 = arith.constant 0 : index
    %c0_11 = arith.constant 0 : index
    %42 = vector.load %arg4[%c0_10, %c0_11] : memref<16x1xf32, #tpu.memory_space<vmem>>, vector<16x1xf32>
    %cst_12 = arith.constant 0.000000e+00 : f32
    %43 = vector.shape_cast %42 : vector<16x1xf32> to vector<16x1xf32>
    %44 = vector.broadcast %43 : vector<16x1xf32> to vector<16x8xf32>
    %45 = vector.broadcast %cst_12 : f32 to vector<16x8xf32>
    %46 = arith.select %41, %44, %45 : vector<16x8xi1>, vector<16x8xf32>
    %cst_13 = arith.constant dense<0.000000e+00> : vector<8xf32>
    %47 = vector.multi_reduction <add>, %46, %cst_13 [0] : vector<16x8xf32> to vector<8xf32>
    %48 = vector.shape_cast %47 : vector<8xf32> to vector<1x8xf32>
    %49 = arith.addf %30, %39 : vector<1x8xf32>
    %50 = arith.addf %49, %48 : vector<1x8xf32>
    %c0_14 = arith.constant 0 : index
    %c0_15 = arith.constant 0 : index
    %51 = vector.load %arg5[%c0_14, %c0_15] : memref<1x8xf32, #tpu.memory_space<vmem>>, vector<1x8xf32>
    tpu.vector_store %arg5[%c0_14, %c0_15], %50 {strides = array<i32>} : memref<1x8xf32, #tpu.memory_space<vmem>>, vector<1x8xf32>,
    return
  }
  func.func @transform_0(%arg0: i32) -> (i32, i32) {
    %c0_i32 = arith.constant 0 : i32
    %c0_i32_0 = arith.constant 0 : i32
    return %c0_i32, %arg0 : i32, i32
  }
  func.func @transform_1(%arg0: i32) -> (i32, i32) {
    %c0_i32 = arith.constant 0 : i32
    %c0_i32_0 = arith.constant 0 : i32
    %c0_i32_1 = arith.constant 0 : i32
    return %c0_i32, %c0_i32_0 : i32, i32
  }
  func.func @transform_2(%arg0: i32) -> (i32, i32) {
    %c0_i32 = arith.constant 0 : i32
    %c0_i32_0 = arith.constant 0 : i32
    %c0_i32_1 = arith.constant 0 : i32
    return %c0_i32, %c0_i32_0 : i32, i32
  }
  func.func @transform_3(%arg0: i32) -> (i32, i32) {
    %c0_i32 = arith.constant 0 : i32
    %c0_i32_0 = arith.constant 0 : i32
    %c0_i32_1 = arith.constant 0 : i32
    return %c0_i32, %c0_i32_0 : i32, i32
  }
  func.func @transform_4(%arg0: i32) -> (i32, i32) {
    %c0_i32 = arith.constant 0 : i32
    %c0_i32_0 = arith.constant 0 : i32
    return %c0_i32, %arg0 : i32, i32
  }
}

</mosaic_0001>

<llo_original>
// kernel: _is_loss_impl.1
$region0: #{_is_loss_impl.1}
  #allocation0 [shape = 'u32[]', space=smem, size = 0x4, offset = 0x4, fixed_abs, tag = 'smem constant byte address 0x4 - core index']
  #allocation1 [shape = 'u32[144,128]{1,0:T(1,128)}', space=vmem, size = 0x12000, scoped, tag = 'internal scratch']
  %s0 = inlined_call_operand.vmem [shape: u32[16,8], index: 0, kind: input, shape index: {}]
  %s1 = inlined_call_operand.vmem [shape: f32[16,16], index: 1, kind: input, shape index: {}]
  %s2 = inlined_call_operand.vmem [shape: f32[16,1], index: 2, kind: input, shape index: {}]
  %s3 = inlined_call_operand.vmem [shape: f32[16,1], index: 3, kind: input, shape index: {}]
  %s4 = inlined_call_operand.vmem [shape: f32[1,8], index: 4, kind: output, shape index: {}]
  %s5 = sld [smem:[#allocation0]]
  $region26: #{_is_loss_impl.1} parent=0
    _
  %s7 = ssub.s32 1, %s5
  %s8 = scalar_select 0, %s7, %s5
  // Predicated region
  $region2: #{_is_loss_impl.1} parent=0 // pred_check
    _
  $region3: #{_is_loss_impl.1} parent=0 // pred_check_branch
    %10 = sbr.rel (0) target = $region5
  $region4: #{_is_loss_impl.1} parent=0 // pred_region
    _
  $region5: #{_is_loss_impl.1} parent=0 // pred_fallthru
    _
  // Predicated region
  $region6: #{_is_loss_impl.1} parent=0 // pred_check
    _
  $region7: #{_is_loss_impl.1} parent=0 // pred_check_branch
    %12 = sbr.rel (0) target = $region9
  $region8: #{_is_loss_impl.1} parent=0 // pred_region
    _
  $region9: #{_is_loss_impl.1} parent=0 // pred_fallthru
    _
  // Predicated region
  $region10: #{_is_loss_impl.1} parent=0 // pred_check
    _
  $region11: #{_is_loss_impl.1} parent=0 // pred_check_branch
    %14 = sbr.rel (0) target = $region13
  $region12: #{_is_loss_impl.1} parent=0 // pred_region
    _
  $region13: #{_is_loss_impl.1} parent=0 // pred_fallthru
    _
  // Predicated region
  $region14: #{_is_loss_impl.1} parent=0 // pred_check
    _
  $region15: #{_is_loss_impl.1} parent=0 // pred_check_branch
    %16 = sbr.rel (0) target = $region17
  $region16: #{_is_loss_impl.1} parent=0 // pred_region
    _
  $region17: #{_is_loss_impl.1} parent=0 // pred_fallthru
    _
  %v17 = vld [vmem:[%s0] sm:$0xff]
  %v18 = vld [vmem:[%s0 + $0x8] sm:$0xff]
  %v19 = vshrl.u32 %v17, 9
  %v20 = vshrl.u32 %v18, 9
  %v21 = vlaneseq
  %v22 = vshrl.u32 %v21, 7
  %v23 = vadd.s32 %v22, 8
  %v24 = vshll.u32 %v19, 8
  %v25 = vshll.u32 %v20, 8
  %v26 = vor.u32 %v24, %v22
  %v27 = vor.u32 %v25, %v23
  %v28 = vcombine.high %v26, %v26
  %v30 = vunpack.c.l.s4 1966171168
  %v31 = vunpack.c.0.s8 %v30
  %v32 = vlaneseq
  %v33 = vshrl.u32 %v32, 7
  %v34 = vsub.s32 %v31, %v33
  %v35 = vrot.slane %v26, %v34
  %v37 = vunpack.c.l.s4 1966171168
  %v38 = vunpack.c.0.s8 %v37
  %v39 = vlaneseq
  %v40 = vshrl.u32 %v39, 7
  %v41 = vsub.s32 %v38, %v40
  %v42 = vrot.slane %v28, %v41
  %v43 = vcombine.high %v35, %v35
  %v44 = vcombine.high %v42, %v42
  %v46 = vunpack.c.l.s4 1966171168
  %v47 = vunpack.c.0.s8 %v46
  %v48 = vlaneseq
  %v49 = vshrl.u32 %v48, 7
  %v50 = vsub.s32 %v47, %v49
  %v51 = vrot.slane %v35, %v50
  %v53 = vunpack.c.l.s4 1966171168
  %v54 = vunpack.c.0.s8 %v53
  %v55 = vlaneseq
  %v56 = vshrl.u32 %v55, 7
  %v57 = vsub.s32 %v54, %v56
  %v58 = vrot.slane %v42, %v57
  %v60 = vunpack.c.l.s4 1966171168
  %v61 = vunpack.c.0.s8 %v60
  %v62 = vlaneseq
  %v63 = vshrl.u32 %v62, 7
  %v64 = vsub.s32 %v61, %v63
  %v65 = vrot.slane %v43, %v64
  %v67 = vunpack.c.l.s4 1966171168
  %v68 = vunpack.c.0.s8 %v67
  %v69 = vlaneseq
  %v70 = vshrl.u32 %v69, 7
  %v71 = vsub.s32 %v68, %v70
  %v72 = vrot.slane %v44, %v71
  %v73 = vcombine.high %v51, %v51
  %v74 = vcombine.high %v58, %v58
  %v75 = vcombine.high %v65, %v65
  %v76 = vcombine.high %v72, %v72
  %v77 = vcombine.high %v27, %v27
  %v79 = vunpack.c.l.s4 1966171168
  %v80 = vunpack.c.0.s8 %v79
  %v81 = vlaneseq
  %v82 = vshrl.u32 %v81, 7
  %v83 = vsub.s32 %v80, %v82
  %v84 = vrot.slane %v27, %v83
  %v86 = vunpack.c.l.s4 1966171168
  %v87 = vunpack.c.0.s8 %v86
  %v88 = vlaneseq
  %v89 = vshrl.u32 %v88, 7
  %v90 = vsub.s32 %v87, %v89
  %v91 = vrot.slane %v77, %v90
  %v92 = vcombine.high %v84, %v84
  %v93 = vcombine.high %v91, %v91
  %v95 = vunpack.c.l.s4 1966171168
  %v96 = vunpack.c.0.s8 %v95
  %v97 = vlaneseq
  %v98 = vshrl.u32 %v97, 7
  %v99 = vsub.s32 %v96, %v98
  %v100 = vrot.slane %v84, %v99
  %v102 = vunpack.c.l.s4 1966171168
  %v103 = vunpack.c.0.s8 %v102
  %v104 = vlaneseq
  %v105 = vshrl.u32 %v104, 7
  %v106 = vsub.s32 %v103, %v105
  %v107 = vrot.slane %v91, %v106
  %v109 = vunpack.c.l.s4 1966171168
  %v110 = vunpack.c.0.s8 %v109
  %v111 = vlaneseq
  %v112 = vshrl.u32 %v111, 7
  %v113 = vsub.s32 %v110, %v112
  %v114 = vrot.slane %v92, %v113
  %v116 = vunpack.c.l.s4 1966171168
  %v117 = vunpack.c.0.s8 %v116
  %v118 = vlaneseq
  %v119 = vshrl.u32 %v118, 7
  %v120 = vsub.s32 %v117, %v119
  %v121 = vrot.slane %v93, %v120
  %v122 = vcombine.high %v100, %v100
  %v123 = vcombine.high %v107, %v107
  %v124 = vcombine.high %v114, %v114
  %v125 = vcombine.high %v121, %v121
  %v126 = vlaneseq
  %v127 = vshrl.u32 %v126, 7
  %v128 = vsub.s32 0, %v127
  %v129 = vrot.slane %v51, %v128
  %v130 = vlaneseq
  %v131 = vshrl.u32 %v130, 7
  %v132 = vsub.s32 0, %v131
  %v133 = vrot.slane %v65, %v132
  %v134 = vlaneseq
  %v135 = vshrl.u32 %v134, 7
  %v136 = vsub.s32 0, %v135
  %v137 = vrot.slane %v73, %v136
  %v138 = vlaneseq
  %v139 = vshrl.u32 %v138, 7
  %v140 = vsub.s32 0, %v139
  %v141 = vrot.slane %v75, %v140
  %v142 = vlaneseq
  %v143 = vshrl.u32 %v142, 7
  %v144 = vsub.s32 0, %v143
  %v145 = vrot.slane %v58, %v144
  %v146 = vlaneseq
  %v147 = vshrl.u32 %v146, 7
  %v148 = vsub.s32 0, %v147
  %v149 = vrot.slane %v72, %v148
  %v150 = vlaneseq
  %v151 = vshrl.u32 %v150, 7
  %v152 = vsub.s32 0, %v151
  %v153 = vrot.slane %v74, %v152
  %v154 = vlaneseq
  %v155 = vshrl.u32 %v154, 7
  %v156 = vsub.s32 0, %v155
  %v157 = vrot.slane %v76, %v156
  %v158 = vlaneseq
  %v159 = vshrl.u32 %v158, 7
  %v160 = vsub.s32 0, %v159
  %v161 = vrot.slane %v100, %v160
  %v162 = vlaneseq
  %v163 = vshrl.u32 %v162, 7
  %v164 = vsub.s32 0, %v163
  %v165 = vrot.slane %v114, %v164
  %v166 = vlaneseq
  %v167 = vshrl.u32 %v166, 7
  %v168 = vsub.s32 0, %v167
  %v169 = vrot.slane %v122, %v168
  %v170 = vlaneseq
  %v171 = vshrl.u32 %v170, 7
  %v172 = vsub.s32 0, %v171
  %v173 = vrot.slane %v124, %v172
  %v174 = vlaneseq
  %v175 = vshrl.u32 %v174, 7
  %v176 = vsub.s32 0, %v175
  %v177 = vrot.slane %v107, %v176
  %v178 = vlaneseq
  %v179 = vshrl.u32 %v178, 7
  %v180 = vsub.s32 0, %v179
  %v181 = vrot.slane %v121, %v180
  %v182 = vlaneseq
  %v183 = vshrl.u32 %v182, 7
  %v184 = vsub.s32 0, %v183
  %v185 = vrot.slane %v123, %v184
  %v186 = vlaneseq
  %v187 = vshrl.u32 %v186, 7
  %v188 = vsub.s32 0, %v187
  %v189 = vrot.slane %v125, %v188
  %vm190 = vcmp.lt.s32.totalorder %v129, %v26
  %vm191 = vcmp.lt.s32.totalorder %v129, %v27
  %vm192 = vcmp.lt.s32.totalorder %v133, %v26
  %vm193 = vcmp.lt.s32.totalorder %v133, %v27
  %vm194 = vcmp.lt.s32.totalorder %v137, %v26
  %vm195 = vcmp.lt.s32.totalorder %v137, %v27
  %vm196 = vcmp.lt.s32.totalorder %v141, %v26
  %vm197 = vcmp.lt.s32.totalorder %v141, %v27
  %vm198 = vcmp.lt.s32.totalorder %v145, %v26
  %vm199 = vcmp.lt.s32.totalorder %v145, %v27
  %vm200 = vcmp.lt.s32.totalorder %v149, %v26
  %vm201 = vcmp.lt.s32.totalorder %v149, %v27
  %vm202 = vcmp.lt.s32.totalorder %v153, %v26
  %vm203 = vcmp.lt.s32.totalorder %v153, %v27
  %vm204 = vcmp.lt.s32.totalorder %v157, %v26
  %vm205 = vcmp.lt.s32.totalorder %v157, %v27
  %vm206 = vcmp.lt.s32.totalorder %v161, %v26
  %vm207 = vcmp.lt.s32.totalorder %v161, %v27
  %vm208 = vcmp.lt.s32.totalorder %v165, %v26
  %vm209 = vcmp.lt.s32.totalorder %v165, %v27
  %vm210 = vcmp.lt.s32.totalorder %v169, %v26
  %vm211 = vcmp.lt.s32.totalorder %v169, %v27
  %vm212 = vcmp.lt.s32.totalorder %v173, %v26
  %vm213 = vcmp.lt.s32.totalorder %v173, %v27
  %vm214 = vcmp.lt.s32.totalorder %v177, %v26
  %vm215 = vcmp.lt.s32.totalorder %v177, %v27
  %vm216 = vcmp.lt.s32.totalorder %v181, %v26
  %vm217 = vcmp.lt.s32.totalorder %v181, %v27
  %vm218 = vcmp.lt.s32.totalorder %v185, %v26
  %vm219 = vcmp.lt.s32.totalorder %v185, %v27
  %vm220 = vcmp.lt.s32.totalorder %v189, %v26
  %vm221 = vcmp.lt.s32.totalorder %v189, %v27
  %v222 = vsel %vm190, 1, 0
  %v223 = vsel %vm191, 1, 0
  %v224 = vsel %vm192, 1, 0
  %v225 = vsel %vm193, 1, 0
  %v226 = vsel %vm194, 1, 0
  %v227 = vsel %vm195, 1, 0
  %v228 = vsel %vm196, 1, 0
  %v229 = vsel %vm197, 1, 0
  %v230 = vsel %vm198, 1, 0
  %v231 = vsel %vm199, 1, 0
  %v232 = vsel %vm200, 1, 0
  %v233 = vsel %vm201, 1, 0
  %v234 = vsel %vm202, 1, 0
  %v235 = vsel %vm203, 1, 0
  %v236 = vsel %vm204, 1, 0
  %v237 = vsel %vm205, 1, 0
  %v238 = vsel %vm206, 1, 0
  %v239 = vsel %vm207, 1, 0
  %v240 = vsel %vm208, 1, 0
  %v241 = vsel %vm209, 1, 0
  %v242 = vsel %vm210, 1, 0
  %v243 = vsel %vm211, 1, 0
  %v244 = vsel %vm212, 1, 0
  %v245 = vsel %vm213, 1, 0
  %v246 = vsel %vm214, 1, 0
  %v247 = vsel %vm215, 1, 0
  %v248 = vsel %vm216, 1, 0
  %v249 = vsel %vm217, 1, 0
  %v250 = vsel %vm218, 1, 0
  %v251 = vsel %vm219, 1, 0
  %v252 = vsel %vm220, 1, 0
  %v253 = vsel %vm221, 1, 0
  %vm254 = vcmask 64512
  %v255 = vsel %vm254, %v222, 0
  %v256 = vsel %vm254, %v224, 0
  %v257 = vsel %vm254, %v226, 0
  %v258 = vadd.s32 %v255, %v257
  %v259 = vsel %vm254, %v228, 0
  %v260 = vadd.s32 %v256, %v259
  %v261 = vsel %vm254, %v230, 0
  %v262 = vadd.s32 %v258, %v261
  %v263 = vsel %vm254, %v232, 0
  %v264 = vadd.s32 %v260, %v263
  %v265 = vsel %vm254, %v234, 0
  %v266 = vadd.s32 %v262, %v265
  %v267 = vsel %vm254, %v236, 0
  %v268 = vadd.s32 %v264, %v267
  %v269 = vsel %vm254, %v238, 0
  %v270 = vadd.s32 %v266, %v269
  %v271 = vsel %vm254, %v240, 0
  %v272 = vadd.s32 %v268, %v271
  %v273 = vsel %vm254, %v242, 0
  %v274 = vadd.s32 %v270, %v273
  %v275 = vsel %vm254, %v244, 0
  %v276 = vadd.s32 %v272, %v275
  %v277 = vsel %vm254, %v246, 0
  %v278 = vadd.s32 %v274, %v277
  %v279 = vsel %vm254, %v248, 0
  %v280 = vadd.s32 %v276, %v279
  %v281 = vsel %vm254, %v250, 0
  %v282 = vadd.s32 %v278, %v281
  %v283 = vsel %vm254, %v252, 0
  %v284 = vadd.s32 %v280, %v283
  %v285 = vadd.s32 %v282, %v284
  %v286 = vsel %vm254, %v223, 0
  %v287 = vsel %vm254, %v225, 0
  %v288 = vsel %vm254, %v227, 0
  %v289 = vadd.s32 %v286, %v288
  %v290 = vsel %vm254, %v229, 0
  %v291 = vadd.s32 %v287, %v290
  %v292 = vsel %vm254, %v231, 0
  %v293 = vadd.s32 %v289, %v292
  %v294 = vsel %vm254, %v233, 0
  %v295 = vadd.s32 %v291, %v294
  %v296 = vsel %vm254, %v235, 0
  %v297 = vadd.s32 %v293, %v296
  %v298 = vsel %vm254, %v237, 0
  %v299 = vadd.s32 %v295, %v298
  %v300 = vsel %vm254, %v239, 0
  %v301 = vadd.s32 %v297, %v300
  %v302 = vsel %vm254, %v241, 0
  %v303 = vadd.s32 %v299, %v302
  %v304 = vsel %vm254, %v243, 0
  %v305 = vadd.s32 %v301, %v304
  %v306 = vsel %vm254, %v245, 0
  %v307 = vadd.s32 %v303, %v306
  %v308 = vsel %vm254, %v247, 0
  %v309 = vadd.s32 %v305, %v308
  %v310 = vsel %vm254, %v249, 0
  %v311 = vadd.s32 %v307, %v310
  %v312 = vsel %vm254, %v251, 0
  %v313 = vadd.s32 %v309, %v312
  %v314 = vsel %vm254, %v253, 0
  %v315 = vadd.s32 %v311, %v314
  %v316 = vadd.s32 %v313, %v315
  %v317 = vcombine.high %v285, %v285
  %v319 = vunpack.c.l.s4 1966171168
  %v320 = vunpack.c.0.s8 %v319
  %v321 = vlaneseq
  %v322 = vshrl.u32 %v321, 7
  %v323 = vsub.s32 %v320, %v322
  %v324 = vrot.slane %v285, %v323
  %v326 = vunpack.c.l.s4 1966171168
  %v327 = vunpack.c.0.s8 %v326
  %v328 = vlaneseq
  %v329 = vshrl.u32 %v328, 7
  %v330 = vsub.s32 %v327, %v329
  %v331 = vrot.slane %v317, %v330
  %v332 = vcombine.high %v324, %v324
  %v333 = vcombine.high %v331, %v331
  %v335 = vunpack.c.l.s4 1966171168
  %v336 = vunpack.c.0.s8 %v335
  %v337 = vlaneseq
  %v338 = vshrl.u32 %v337, 7
  %v339 = vsub.s32 %v336, %v338
  %v340 = vrot.slane %v324, %v339
  %v342 = vunpack.c.l.s4 1966171168
  %v343 = vunpack.c.0.s8 %v342
  %v344 = vlaneseq
  %v345 = vshrl.u32 %v344, 7
  %v346 = vsub.s32 %v343, %v345
  %v347 = vrot.slane %v331, %v346
  %v349 = vunpack.c.l.s4 1966171168
  %v350 = vunpack.c.0.s8 %v349
  %v351 = vlaneseq
  %v352 = vshrl.u32 %v351, 7
  %v353 = vsub.s32 %v350, %v352
  %v354 = vrot.slane %v332, %v353
  %v356 = vunpack.c.l.s4 1966171168
  %v357 = vunpack.c.0.s8 %v356
  %v358 = vlaneseq
  %v359 = vshrl.u32 %v358, 7
  %v360 = vsub.s32 %v357, %v359
  %v361 = vrot.slane %v333, %v360
  %v362 = vcombine.high %v340, %v340
  %v363 = vcombine.high %v347, %v347
  %v364 = vcombine.high %v354, %v354
  %v365 = vcombine.high %v361, %v361
  %v366 = vcombine.high %v316, %v316
  %v368 = vunpack.c.l.s4 1966171168
  %v369 = vunpack.c.0.s8 %v368
  %v370 = vlaneseq
  %v371 = vshrl.u32 %v370, 7
  %v372 = vsub.s32 %v369, %v371
  %v373 = vrot.slane %v316, %v372
  %v375 = vunpack.c.l.s4 1966171168
  %v376 = vunpack.c.0.s8 %v375
  %v377 = vlaneseq
  %v378 = vshrl.u32 %v377, 7
  %v379 = vsub.s32 %v376, %v378
  %v380 = vrot.slane %v366, %v379
  %v381 = vcombine.high %v373, %v373
  %v382 = vcombine.high %v380, %v380
  %v384 = vunpack.c.l.s4 1966171168
  %v385 = vunpack.c.0.s8 %v384
  %v386 = vlaneseq
  %v387 = vshrl.u32 %v386, 7
  %v388 = vsub.s32 %v385, %v387
  %v389 = vrot.slane %v373, %v388
  %v391 = vunpack.c.l.s4 1966171168
  %v392 = vunpack.c.0.s8 %v391
  %v393 = vlaneseq
  %v394 = vshrl.u32 %v393, 7
  %v395 = vsub.s32 %v392, %v394
  %v396 = vrot.slane %v380, %v395
  %v398 = vunpack.c.l.s4 1966171168
  %v399 = vunpack.c.0.s8 %v398
  %v400 = vlaneseq
  %v401 = vshrl.u32 %v400, 7
  %v402 = vsub.s32 %v399, %v401
  %v403 = vrot.slane %v381, %v402
  %v405 = vunpack.c.l.s4 1966171168
  %v406 = vunpack.c.0.s8 %v405
  %v407 = vlaneseq
  %v408 = vshrl.u32 %v407, 7
  %v409 = vsub.s32 %v406, %v408
  %v410 = vrot.slane %v382, %v409
  %v411 = vcombine.high %v389, %v389
  %v412 = vcombine.high %v396, %v396
  %v413 = vcombine.high %v403, %v403
  %v414 = vcombine.high %v410, %v410
  %v415 = vadd.s32 %v340, 1
  %v416 = vadd.s32 %v354, 1
  %v417 = vadd.s32 %v362, 1
  %v418 = vadd.s32 %v364, 1
  %v419 = vadd.s32 %v347, 1
  %v420 = vadd.s32 %v361, 1
  %v421 = vadd.s32 %v363, 1
  %v422 = vadd.s32 %v365, 1
  %v423 = vadd.s32 %v389, 1
  %v424 = vadd.s32 %v403, 1
  %v425 = vadd.s32 %v411, 1
  %v426 = vadd.s32 %v413, 1
  %v427 = vadd.s32 %v396, 1
  %v428 = vadd.s32 %v410, 1
  %v429 = vadd.s32 %v412, 1
  %v430 = vadd.s32 %v414, 1
  %v431 = vlaneseq
  %v432 = vshrl.u32 %v431, 7
  %v433 = vsub.s32 0, %v432
  %v434 = vrot.slane %v415, %v433
  %v435 = vlaneseq
  %v436 = vshrl.u32 %v435, 7
  %v437 = vsub.s32 0, %v436
  %v438 = vrot.slane %v416, %v437
  %v439 = vlaneseq
  %v440 = vshrl.u32 %v439, 7
  %v441 = vsub.s32 0, %v440
  %v442 = vrot.slane %v417, %v441
  %v443 = vlaneseq
  %v444 = vshrl.u32 %v443, 7
  %v445 = vsub.s32 0, %v444
  %v446 = vrot.slane %v418, %v445
  %v447 = vlaneseq
  %v448 = vshrl.u32 %v447, 7
  %v449 = vsub.s32 0, %v448
  %v450 = vrot.slane %v419, %v449
  %v451 = vlaneseq
  %v452 = vshrl.u32 %v451, 7
  %v453 = vsub.s32 0, %v452
  %v454 = vrot.slane %v420, %v453
  %v455 = vlaneseq
  %v456 = vshrl.u32 %v455, 7
  %v457 = vsub.s32 0, %v456
  %v458 = vrot.slane %v421, %v457
  %v459 = vlaneseq
  %v460 = vshrl.u32 %v459, 7
  %v461 = vsub.s32 0, %v460
  %v462 = vrot.slane %v422, %v461
  %v463 = vlaneseq
  %v464 = vshrl.u32 %v463, 7
  %v465 = vsub.s32 0, %v464
  %v466 = vrot.slane %v423, %v465
  %v467 = vlaneseq
  %v468 = vshrl.u32 %v467, 7
  %v469 = vsub.s32 0, %v468
  %v470 = vrot.slane %v424, %v469
  %v471 = vlaneseq
  %v472 = vshrl.u32 %v471, 7
  %v473 = vsub.s32 0, %v472
  %v474 = vrot.slane %v425, %v473
  %v475 = vlaneseq
  %v476 = vshrl.u32 %v475, 7
  %v477 = vsub.s32 0, %v476
  %v478 = vrot.slane %v426, %v477
  %v479 = vlaneseq
  %v480 = vshrl.u32 %v479, 7
  %v481 = vsub.s32 0, %v480
  %v482 = vrot.slane %v427, %v481
  %v483 = vlaneseq
  %v484 = vshrl.u32 %v483, 7
  %v485 = vsub.s32 0, %v484
  %v486 = vrot.slane %v428, %v485
  %v487 = vlaneseq
  %v488 = vshrl.u32 %v487, 7
  %v489 = vsub.s32 0, %v488
  %v490 = vrot.slane %v429, %v489
  %v491 = vlaneseq
  %v492 = vshrl.u32 %v491, 7
  %v493 = vsub.s32 0, %v492
  %v494 = vrot.slane %v430, %v493
  %vm495 = vcmp.eq.s32.totalorder %v285, %v434
  %vm496 = vcmp.eq.s32.totalorder %v316, %v434
  %vm497 = vcmp.eq.s32.totalorder %v285, %v438
  %vm498 = vcmp.eq.s32.totalorder %v316, %v438
  %vm499 = vcmp.eq.s32.totalorder %v285, %v442
  %vm500 = vcmp.eq.s32.totalorder %v316, %v442
  %vm501 = vcmp.eq.s32.totalorder %v285, %v446
  %vm502 = vcmp.eq.s32.totalorder %v316, %v446
  %vm503 = vcmp.eq.s32.totalorder %v285, %v450
  %vm504 = vcmp.eq.s32.totalorder %v316, %v450
  %vm505 = vcmp.eq.s32.totalorder %v285, %v454
  %vm506 = vcmp.eq.s32.totalorder %v316, %v454
  %vm507 = vcmp.eq.s32.totalorder %v285, %v458
  %vm508 = vcmp.eq.s32.totalorder %v316, %v458
  %vm509 = vcmp.eq.s32.totalorder %v285, %v462
  %vm510 = vcmp.eq.s32.totalorder %v316, %v462
  %vm511 = vcmp.eq.s32.totalorder %v285, %v466
  %vm512 = vcmp.eq.s32.totalorder %v316, %v466
  %vm513 = vcmp.eq.s32.totalorder %v285, %v470
  %vm514 = vcmp.eq.s32.totalorder %v316, %v470
  %vm515 = vcmp.eq.s32.totalorder %v285, %v474
  %vm516 = vcmp.eq.s32.totalorder %v316, %v474
  %vm517 = vcmp.eq.s32.totalorder %v285, %v478
  %vm518 = vcmp.eq.s32.totalorder %v316, %v478
  %vm519 = vcmp.eq.s32.totalorder %v285, %v482
  %vm520 = vcmp.eq.s32.totalorder %v316, %v482
  %vm521 = vcmp.eq.s32.totalorder %v285, %v486
  %vm522 = vcmp.eq.s32.totalorder %v316, %v486
  %vm523 = vcmp.eq.s32.totalorder %v285, %v490
  %vm524 = vcmp.eq.s32.totalorder %v316, %v490
  %vm525 = vcmp.eq.s32.totalorder %v285, %v494
  %vm526 = vcmp.eq.s32.totalorder %v316, %v494
  %v527 = vld [vmem:[%s1] sm:$0xff]
  %v528 = vld [vmem:[%s1 + $0x8] sm:$0xff]
  %v529 = vlaneseq
  %v530 = vshrl.u32 %v529, 7
  %v531 = vsub.s32 0, %v530
  %v532 = vrot.slane %v527, %v531
  %534 = vbcast.lane.b32.xlu0 %v532, 256
  %v535 = vpop.permute.xlu0 %534
  %s537 = sor.u32 256, 8
  %538 = vbcast.lane.b32.xlu0 %v532, %s537
  %v539 = vpop.permute.xlu0 %538
  %v540 = vlaneseq
  %v541 = vshrl.u32 %v540, 7
  %v542 = vsub.s32 1, %v541
  %v543 = vrot.slane %v527, %v542
  %545 = vbcast.lane.b32.xlu0 %v543, 256
  %v546 = vpop.permute.xlu0 %545
  %s548 = sor.u32 256, 8
  %549 = vbcast.lane.b32.xlu0 %v543, %s548
  %v550 = vpop.permute.xlu0 %549
  %v551 = vlaneseq
  %v552 = vshrl.u32 %v551, 7
  %v553 = vsub.s32 2, %v552
  %v554 = vrot.slane %v527, %v553
  %556 = vbcast.lane.b32.xlu0 %v554, 256
  %v557 = vpop.permute.xlu0 %556
  %s559 = sor.u32 256, 8
  %560 = vbcast.lane.b32.xlu0 %v554, %s559
  %v561 = vpop.permute.xlu0 %560
  %v562 = vlaneseq
  %v563 = vshrl.u32 %v562, 7
  %v564 = vsub.s32 3, %v563
  %v565 = vrot.slane %v527, %v564
  %567 = vbcast.lane.b32.xlu0 %v565, 256
  %v568 = vpop.permute.xlu0 %567
  %s570 = sor.u32 256, 8
  %571 = vbcast.lane.b32.xlu0 %v565, %s570
  %v572 = vpop.permute.xlu0 %571
  %v573 = vlaneseq
  %v574 = vshrl.u32 %v573, 7
  %v575 = vsub.s32 4, %v574
  %v576 = vrot.slane %v527, %v575
  %578 = vbcast.lane.b32.xlu0 %v576, 256
  %v579 = vpop.permute.xlu0 %578
  %s581 = sor.u32 256, 8
  %582 = vbcast.lane.b32.xlu0 %v576, %s581
  %v583 = vpop.permute.xlu0 %582
  %v584 = vlaneseq
  %v585 = vshrl.u32 %v584, 7
  %v586 = vsub.s32 5, %v585
  %v587 = vrot.slane %v527, %v586
  %589 = vbcast.lane.b32.xlu0 %v587, 256
  %v590 = vpop.permute.xlu0 %589
  %s592 = sor.u32 256, 8
  %593 = vbcast.lane.b32.xlu0 %v587, %s592
  %v594 = vpop.permute.xlu0 %593
  %v595 = vlaneseq
  %v596 = vshrl.u32 %v595, 7
  %v597 = vsub.s32 6, %v596
  %v598 = vrot.slane %v527, %v597
  %600 = vbcast.lane.b32.xlu0 %v598, 256
  %v601 = vpop.permute.xlu0 %600
  %s603 = sor.u32 256, 8
  %604 = vbcast.lane.b32.xlu0 %v598, %s603
  %v605 = vpop.permute.xlu0 %604
  %v606 = vlaneseq
  %v607 = vshrl.u32 %v606, 7
  %v608 = vsub.s32 7, %v607
  %v609 = vrot.slane %v527, %v608
  %611 = vbcast.lane.b32.xlu0 %v609, 256
  %v612 = vpop.permute.xlu0 %611
  %s614 = sor.u32 256, 8
  %615 = vbcast.lane.b32.xlu0 %v609, %s614
  %v616 = vpop.permute.xlu0 %615
  %v617 = vlaneseq
  %v618 = vshrl.u32 %v617, 7
  %v619 = vsub.s32 0, %v618
  %v620 = vrot.slane %v528, %v619
  %622 = vbcast.lane.b32.xlu0 %v620, 256
  %v623 = vpop.permute.xlu0 %622
  %s625 = sor.u32 256, 8
  %626 = vbcast.lane.b32.xlu0 %v620, %s625
  %v627 = vpop.permute.xlu0 %626
  %v628 = vlaneseq
  %v629 = vshrl.u32 %v628, 7
  %v630 = vsub.s32 1, %v629
  %v631 = vrot.slane %v528, %v630
  %633 = vbcast.lane.b32.xlu0 %v631, 256
  %v634 = vpop.permute.xlu0 %633
  %s636 = sor.u32 256, 8
  %637 = vbcast.lane.b32.xlu0 %v631, %s636
  %v638 = vpop.permute.xlu0 %637
  %v639 = vlaneseq
  %v640 = vshrl.u32 %v639, 7
  %v641 = vsub.s32 2, %v640
  %v642 = vrot.slane %v528, %v641
  %644 = vbcast.lane.b32.xlu0 %v642, 256
  %v645 = vpop.permute.xlu0 %644
  %s647 = sor.u32 256, 8
  %648 = vbcast.lane.b32.xlu0 %v642, %s647
  %v649 = vpop.permute.xlu0 %648
  %v650 = vlaneseq
  %v651 = vshrl.u32 %v650, 7
  %v652 = vsub.s32 3, %v651
  %v653 = vrot.slane %v528, %v652
  %655 = vbcast.lane.b32.xlu0 %v653, 256
  %v656 = vpop.permute.xlu0 %655
  %s658 = sor.u32 256, 8
  %659 = vbcast.lane.b32.xlu0 %v653, %s658
  %v660 = vpop.permute.xlu0 %659
  %v661 = vlaneseq
  %v662 = vshrl.u32 %v661, 7
  %v663 = vsub.s32 4, %v662
  %v664 = vrot.slane %v528, %v663
  %666 = vbcast.lane.b32.xlu0 %v664, 256
  %v667 = vpop.permute.xlu0 %666
  %s669 = sor.u32 256, 8
  %670 = vbcast.lane.b32.xlu0 %v664, %s669
  %v671 = vpop.permute.xlu0 %670
  %v672 = vlaneseq
  %v673 = vshrl.u32 %v672, 7
  %v674 = vsub.s32 5, %v673
  %v675 = vrot.slane %v528, %v674
  %677 = vbcast.lane.b32.xlu0 %v675, 256
  %v678 = vpop.permute.xlu0 %677
  %s680 = sor.u32 256, 8
  %681 = vbcast.lane.b32.xlu0 %v675, %s680
  %v682 = vpop.permute.xlu0 %681
  %v683 = vlaneseq
  %v684 = vshrl.u32 %v683, 7
  %v685 = vsub.s32 6, %v684
  %v686 = vrot.slane %v528, %v685
  %688 = vbcast.lane.b32.xlu0 %v686, 256
  %v689 = vpop.permute.xlu0 %688
  %s691 = sor.u32 256, 8
  %692 = vbcast.lane.b32.xlu0 %v686, %s691
  %v693 = vpop.permute.xlu0 %692
  %v694 = vlaneseq
  %v695 = vshrl.u32 %v694, 7
  %v696 = vsub.s32 7, %v695
  %v697 = vrot.slane %v528, %v696
  %699 = vbcast.lane.b32.xlu0 %v697, 256
  %v700 = vpop.permute.xlu0 %699
  %s702 = sor.u32 256, 8
  %703 = vbcast.lane.b32.xlu0 %v697, %s702
  %v704 = vpop.permute.xlu0 %703
  %v705 = vsel %vm495, %v535, 0.0
  %v706 = vsel %vm496, %v539, 0.0
  %v707 = vsel %vm497, %v546, 0.0
  %v708 = vsel %vm498, %v550, 0.0
  %v709 = vsel %vm499, %v557, 0.0
  %v710 = vsel %vm500, %v561, 0.0
  %v711 = vsel %vm501, %v568, 0.0
  %v712 = vsel %vm502, %v572, 0.0
  %v713 = vsel %vm503, %v579, 0.0
  %v714 = vsel %vm504, %v583, 0.0
  %v715 = vsel %vm505, %v590, 0.0
  %v716 = vsel %vm506, %v594, 0.0
  %v717 = vsel %vm507, %v601, 0.0
  %v718 = vsel %vm508, %v605, 0.0
  %v719 = vsel %vm509, %v612, 0.0
  %v720 = vsel %vm510, %v616, 0.0
  %v721 = vsel %vm511, %v623, 0.0
  %v722 = vsel %vm512, %v627, 0.0
  %v723 = vsel %vm513, %v634, 0.0
  %v724 = vsel %vm514, %v638, 0.0
  %v725 = vsel %vm515, %v645, 0.0
  %v726 = vsel %vm516, %v649, 0.0
  %v727 = vsel %vm517, %v656, 0.0
  %v728 = vsel %vm518, %v660, 0.0
  %v729 = vsel %vm519, %v667, 0.0
  %v730 = vsel %vm520, %v671, 0.0
  %v731 = vsel %vm521, %v678, 0.0
  %v732 = vsel %vm522, %v682, 0.0
  %v733 = vsel %vm523, %v689, 0.0
  %v734 = vsel %vm524, %v693, 0.0
  %v735 = vsel %vm525, %v700, 0.0
  %v736 = vsel %vm526, %v704, 0.0
  %v737 = vsel %vm254, %v705, 0.0
  %v738 = vsel %vm254, %v707, 0.0
  %v739 = vadd.f32 %v737, %v738
  %v740 = vsel %vm254, %v709, 0.0
  %v741 = vadd.f32 %v739, %v740
  %v742 = vsel %vm254, %v711, 0.0
  %v743 = vadd.f32 %v741, %v742
  %v744 = vsel %vm254, %v713, 0.0
  %v745 = vadd.f32 %v743, %v744
  %v746 = vsel %vm254, %v715, 0.0
  %v747 = vadd.f32 %v745, %v746
  %v748 = vsel %vm254, %v717, 0.0
  %v749 = vadd.f32 %v747, %v748
  %v750 = vsel %vm254, %v719, 0.0
  %v751 = vadd.f32 %v749, %v750
  %v752 = vsel %vm254, %v721, 0.0
  %v753 = vadd.f32 %v751, %v752
  %v754 = vsel %vm254, %v723, 0.0
  %v755 = vadd.f32 %v753, %v754
  %v756 = vsel %vm254, %v725, 0.0
  %v757 = vadd.f32 %v755, %v756
  %v758 = vsel %vm254, %v727, 0.0
  %v759 = vadd.f32 %v757, %v758
  %v760 = vsel %vm254, %v729, 0.0
  %v761 = vadd.f32 %v759, %v760
  %v762 = vsel %vm254, %v731, 0.0
  %v763 = vadd.f32 %v761, %v762
  %v764 = vsel %vm254, %v733, 0.0
  %v765 = vadd.f32 %v763, %v764
  %v766 = vsel %vm254, %v735, 0.0
  %v767 = vadd.f32 %v765, %v766
  %v768 = vsel %vm254, %v706, 0.0
  %v769 = vsel %vm254, %v708, 0.0
  %v770 = vadd.f32 %v768, %v769
  %v771 = vsel %vm254, %v710, 0.0
  %v772 = vadd.f32 %v770, %v771
  %v773 = vsel %vm254, %v712, 0.0
  %v774 = vadd.f32 %v772, %v773
  %v775 = vsel %vm254, %v714, 0.0
  %v776 = vadd.f32 %v774, %v775
  %v777 = vsel %vm254, %v716, 0.0
  %v778 = vadd.f32 %v776, %v777
  %v779 = vsel %vm254, %v718, 0.0
  %v780 = vadd.f32 %v778, %v779
  %v781 = vsel %vm254, %v720, 0.0
  %v782 = vadd.f32 %v780, %v781
  %v783 = vsel %vm254, %v722, 0.0
  %v784 = vadd.f32 %v782, %v783
  %v785 = vsel %vm254, %v724, 0.0
  %v786 = vadd.f32 %v784, %v785
  %v787 = vsel %vm254, %v726, 0.0
  %v788 = vadd.f32 %v786, %v787
  %v789 = vsel %vm254, %v728, 0.0
  %v790 = vadd.f32 %v788, %v789
  %v791 = vsel %vm254, %v730, 0.0
  %v792 = vadd.f32 %v790, %v791
  %v793 = vsel %vm254, %v732, 0.0
  %v794 = vadd.f32 %v792, %v793
  %v795 = vsel %vm254, %v734, 0.0
  %v796 = vadd.f32 %v794, %v795
  %v797 = vsel %vm254, %v736, 0.0
  %v798 = vadd.f32 %v796, %v797
  %v799 = vsel %vm254, %v767, 0.0
  %v800 = vsel %vm254, %v798, 0.0
  %v801 = vadd.f32 %v799, %v800
  %v802 = vrot.slane %v801, 4
  %v803 = vadd.f32 %v801, %v802
  %v804 = vrot.slane %v803, 2
  %v805 = vadd.f32 %v803, %v804
  %v806 = vrot.slane %v805, 1
  %v807 = vadd.f32 %v805, %v806
  %vm808 = vcmp.eq.s32.totalorder %v285, 0
  %vm809 = vcmp.eq.s32.totalorder %v316, 0
  %v810 = vld [vmem:[%s2] sm:$0xff]
  %v811 = vld [vmem:[%s2 + $0x8] sm:$0xff]
  %813 = vset.pattern.permute.xlu0 0
  %814 = vperm.xlu0 %813, %v810
  %v815 = vpop.permute.xlu0 %814
  %818 = vset.pattern.permute.xlu0 0
  %819 = vperm.xlu0 %818, %v811
  %v820 = vpop.permute.xlu0 %819
  %v822 = vsel %vm808, %v815, 0.0
  %v823 = vsel %vm809, %v820, 0.0
  %v824 = vsel %vm254, %v822, 0.0
  %v825 = vsel %vm254, %v823, 0.0
  %v826 = vadd.f32 %v824, %v825
  %v827 = vrot.slane %v826, 4
  %v828 = vadd.f32 %v826, %v827
  %v829 = vrot.slane %v828, 2
  %v830 = vadd.f32 %v828, %v829
  %v831 = vrot.slane %v830, 1
  %v832 = vadd.f32 %v830, %v831
  %vm833 = vcmp.eq.s32.totalorder %v285, 15
  %vm834 = vcmp.eq.s32.totalorder %v316, 15
  %v835 = vld [vmem:[%s3] sm:$0xff]
  %v836 = vld [vmem:[%s3 + $0x8] sm:$0xff]
  %838 = vset.pattern.permute.xlu0 0
  %839 = vperm.xlu0 %838, %v835
  %v840 = vpop.permute.xlu0 %839
  %843 = vset.pattern.permute.xlu0 0
  %844 = vperm.xlu0 %843, %v836
  %v845 = vpop.permute.xlu0 %844
  %v847 = vsel %vm833, %v840, 0.0
  %v848 = vsel %vm834, %v845, 0.0
  %v849 = vsel %vm254, %v847, 0.0
  %v850 = vsel %vm254, %v848, 0.0
  %v851 = vadd.f32 %v849, %v850
  %v852 = vrot.slane %v851, 4
  %v853 = vadd.f32 %v851, %v852
  %v854 = vrot.slane %v853, 2
  %v855 = vadd.f32 %v853, %v854
  %v856 = vrot.slane %v855, 1
  %v857 = vadd.f32 %v855, %v856
  %v858 = vadd.f32 %v807, %v832
  %v859 = vadd.f32 %v858, %v857
  %vm860 = vcmask 57344
  %861 = vst.msk [vmem:[%s4] sm:$0x1] %vm860, %v859
  // Predicated region
  $region18: #{_is_loss_impl.1} parent=0 // pred_check
    _
  $region19: #{_is_loss_impl.1} parent=0 // pred_check_branch
    %863 = sbr.rel (0) target = $region21
  $region20: #{_is_loss_impl.1} parent=0 // pred_region
    _
  $region21: #{_is_loss_impl.1} parent=0 // pred_fallthru
    _
  // Predicated region
  $region22: #{_is_loss_impl.1} parent=0 // pred_check
    _
  $region23: #{_is_loss_impl.1} parent=0 // pred_check_branch
    %865 = sbr.rel (0) target = $region25
  $region24: #{_is_loss_impl.1} parent=0 // pred_region
    _
  $region25: #{_is_loss_impl.1} parent=0 // pred_fallthru
    _

</llo_original>
